<compile_context>
chip_gen: v6e
topology: v6e:2x2x1
jax: 0.10.0
libtpu: 0.0.40
codegen_flags: <defaults>
</compile_context>

<pallas_src>
import jax
import jax.numpy as jnp
import numpy as np
from jax.experimental import pallas as pl
from jax.experimental.pallas import tpu as pltpu

LANE = 128     # vreg lane width
SUBLANE = 8    # f32 sublane count


def _round_up(x, m):
    return ((x + m - 1) // m) * m


def _leaky_relu(x, slope=0.2):
    return jnp.where(x >= 0, x, slope * x)


def mapping_mlp_kernel(z_ref,
                       w1_ref, b1_ref,
                       w2_ref, b2_ref,
                       w3_ref, b3_ref,
                       w4_ref, b4_ref,
                       codes_ref, freq_ref, phase_ref):
    """One batch tile (tb rows).  Weight K/N dims are pre-padded to 128-lane multiples
    (zeros), weights are (in, out) so the MXU computes x @ W.  Matmul operands use the
    weight dtype (bf16 by default); accumulation, bias-add and LeakyReLU run in f32.
    Output stores use the logical (unpadded) widths to minimize HBM writeback."""
    cdt = w1_ref.dtype   # matmul-operand dtype (bf16 default, f32 for exact checks)
    f32 = jnp.float32

    h = jnp.dot(z_ref[...].astype(cdt), w1_ref[...],
                preferred_element_type=f32) + b1_ref[...]
    h = _leaky_relu(h)

    h = jnp.dot(h.astype(cdt), w2_ref[...],
                preferred_element_type=f32) + b2_ref[...]
    h = _leaky_relu(h)

    h = jnp.dot(h.astype(cdt), w3_ref[...],
                preferred_element_type=f32) + b3_ref[...]
    h = _leaky_relu(h)

    # Store only the logical `hidden` columns (block last dim == full array dim).
    hidden = codes_ref.shape[-1]
    codes_ref[...] = h[:, :hidden].astype(codes_ref.dtype)

    fo = jnp.dot(h.astype(cdt), w4_ref[...],
                 preferred_element_type=f32) + b4_ref[...]
    # w4/b4 are laid out as [frequencies | phase_shifts], each half padded to a
    # 128-lane boundary -> both slices start on lane boundaries; stores are the
    # logical `half` width.
    half = freq_ref.shape[-1]
    half_p = w4_ref.shape[-1] // 2
    freq_ref[...] = fo[:, :half].astype(freq_ref.dtype)
    phase_ref[...] = fo[:, half_p:half_p + half].astype(phase_ref.dtype)


def prepare_kernel_params(params, compute_dtype=jnp.bfloat16):
    """Zero-pad the (in, out)-layout weights to 128-lane K/N widths, lay the final layer
    out as [freq | phase] (each half lane-padded), cast weights to the matmul-operand
    dtype (bf16 default), keep biases f32.  Do this once; reuse across calls."""
    z_dim, hidden = params["w1"].shape
    out_dim = params["w4"].shape[1]
    assert out_dim % 2 == 0
    half = out_dim // 2
    z_dim_p = _round_up(z_dim, LANE)
    hid_p = _round_up(hidden, LANE)
    half_p = _round_up(half, LANE)

    def pad2(a, rows, cols):
        return jnp.pad(a, ((0, rows - a.shape[0]), (0, cols - a.shape[1])))

    kp = {
        "w1": pad2(params["w1"], z_dim_p, hid_p).astype(compute_dtype),
        "b1": pad2(params["b1"], 1, hid_p).astype(jnp.float32),
        "w2": pad2(params["w2"], hid_p, hid_p).astype(compute_dtype),
        "b2": pad2(params["b2"], 1, hid_p).astype(jnp.float32),
        "w3": pad2(params["w3"], hid_p, hid_p).astype(compute_dtype),
        "b3": pad2(params["b3"], 1, hid_p).astype(jnp.float32),
    }
    w4, b4 = params["w4"], params["b4"]
    kp["w4"] = jnp.concatenate(
        [pad2(w4[:, :half], hid_p, half_p), pad2(w4[:, half:], hid_p, half_p)],
        axis=1).astype(compute_dtype)
    kp["b4"] = jnp.concatenate(
        [pad2(b4[:, :half], 1, half_p), pad2(b4[:, half:], 1, half_p)],
        axis=1).astype(jnp.float32)

    meta = dict(z_dim=z_dim, z_dim_p=z_dim_p, hidden=hidden, hid_p=hid_p,
                out_dim=out_dim, half=half, half_p=half_p)
    return kp, meta


def _choose_batch_tile(B, block_b):
    """Balanced batch tiles: minimal padding, >= 2 (even) tiles when B > 256 so both
    v7x TensorCores are busy on the 'parallel' axis."""
    n_tiles = max(1, pl.cdiv(B, block_b))
    if B > 256:
        n_tiles = max(n_tiles, 2)
        n_tiles += n_tiles % 2          # even tile count -> balanced across 2 TCs
    tb = _round_up(pl.cdiv(B, n_tiles), SUBLANE)
    bp = _round_up(B, tb)
    return tb, bp


def custom_mapping_network(z, kparams, meta, *, block_b=1024):
    """z: (B, z_dim) f32.  kparams/meta from prepare_kernel_params.
    Returns (frequencies, phase_shifts, mapping_codes) with logical widths."""
    B, z_dim = z.shape
    z_dim_p, hidden, half = meta["z_dim_p"], meta["hidden"], meta["half"]
    hid_p, half_p = meta["hid_p"], meta["half_p"]

    tb, bp = _choose_batch_tile(B, block_b)
    grid = (bp // tb,)

    # One pad of the (small) z input: rows to bp, lanes to the 128-padded K dim.
    if bp != B or z_dim_p != z_dim:
        z = jnp.pad(z, ((0, bp - B), (0, z_dim_p - z_dim)))

    # VMEM budget: double-buffered I/O tiles + in-kernel intermediates + resident
    # weights + slack, capped at 0.75 * physical VMEM (v7x has only 64 MiB / TC).
    w_bytes = sum(int(np.prod(v.shape)) * v.dtype.itemsize for v in kparams.values())
    io_tile_bytes = tb * (z_dim_p + hidden + 2 * half) * 4
    live_bytes = tb * (hid_p + 2 * half_p) * 4
    vmem_need = 2 * io_tile_bytes + 2 * live_bytes + 2 * w_bytes + (16 << 20)
    try:
        vmem_cap = int(pltpu.get_tpu_info().vmem_capacity_bytes)
    except Exception:
        vmem_cap = 64 << 20
    vmem_limit = int(min(vmem_need, int(0.75 * vmem_cap)))

    flops = 2 * bp * (z_dim_p * hid_p + 2 * hid_p * hid_p + hid_p * 2 * half_p)
    bytes_accessed = bp * z_dim_p * 4 + w_bytes + bp * (hidden + 2 * half) * 4
    cost = pl.CostEstimate(flops=int(flops), transcendentals=0,
                           bytes_accessed=int(bytes_accessed))

    def const_spec(shape):
        # Constant index_map -> block stays VMEM-resident across grid steps.
        return pl.BlockSpec(shape, lambda i: (0, 0))

    in_specs = [
        pl.BlockSpec((tb, z_dim_p), lambda i: (i, 0)),
        const_spec(kparams["w1"].shape), const_spec(kparams["b1"].shape),
        const_spec(kparams["w2"].shape), const_spec(kparams["b2"].shape),
        const_spec(kparams["w3"].shape), const_spec(kparams["b3"].shape),
        const_spec(kparams["w4"].shape), const_spec(kparams["b4"].shape),
    ]
    # Outputs use logical widths (block last dim == full array dim -> legal).
    out_specs = (
        pl.BlockSpec((tb, hidden), lambda i: (i, 0)),
        pl.BlockSpec((tb, half), lambda i: (i, 0)),
        pl.BlockSpec((tb, half), lambda i: (i, 0)),
    )
    out_shape = (
        jax.ShapeDtypeStruct((bp, hidden), jnp.float32),
        jax.ShapeDtypeStruct((bp, half), jnp.float32),
        jax.ShapeDtypeStruct((bp, half), jnp.float32),
    )

    codes, freqs, phases = pl.pallas_call(
        mapping_mlp_kernel,
        out_shape=out_shape,
        grid=grid,
        in_specs=in_specs,
        out_specs=out_specs,
        compiler_params=pltpu.CompilerParams(
            dimension_semantics=("parallel",),
            vmem_limit_bytes=vmem_limit),
        cost_estimate=cost,
    )(z,
      kparams["w1"], kparams["b1"],
      kparams["w2"], kparams["b2"],
      kparams["w3"], kparams["b3"],
      kparams["w4"], kparams["b4"])

    if bp != B:  # row-only trim; columns are already logical width
        codes, freqs, phases = codes[:B], freqs[:B], phases[:B]
    return freqs, phases, codes


def init_params(key, z_dim, map_hidden_dim, map_output_dim):
    """Deterministic init mirroring the PyTorch module:
    kaiming_normal_(a=0.2, fan_in, leaky_relu) weights, default uniform biases,
    final-layer weight scaled by 0.25.  Weights returned as (in_dim, out_dim)."""
    dims = [(z_dim, map_hidden_dim),
            (map_hidden_dim, map_hidden_dim),
            (map_hidden_dim, map_hidden_dim),
            (map_hidden_dim, map_output_dim)]
    a = 0.2
    gain = np.sqrt(2.0 / (1.0 + a * a))
    params = {}
    for i, (fan_in, fan_out) in enumerate(dims, start=1):
        key, kw, kb = jax.random.split(key, 3)
        std = gain / np.sqrt(fan_in)
        w = std * jax.random.normal(kw, (fan_in, fan_out), dtype=jnp.float32)
        bound = 1.0 / np.sqrt(fan_in)
        b = jax.random.uniform(kb, (1, fan_out), dtype=jnp.float32,
                               minval=-bound, maxval=bound)
        if i == len(dims):
            w = w * 0.25
        params[f"w{i}"] = w
        params[f"b{i}"] = b
    return params


def reference_forward(z, params):
    """Pure-JAX f32 reference (unpadded logical params)."""
    h = z
    for i in (1, 2, 3):
        h = _leaky_relu(h @ params[f"w{i}"] + params[f"b{i}"])
    codes = h
    fo = h @ params["w4"] + params["b4"]
    half = fo.shape[-1] // 2
    return fo[..., :half], fo[..., half:], codes


if __name__ == "__main__":
    key = jax.random.PRNGKey(0)

    # Small, module-consistent shapes.
    batch = 16
    z_dim = 32
    map_hidden_dim = 64
    map_output_dim = 48   # even -> 24 frequencies + 24 phase shifts

    key, kz, kp = jax.random.split(key, 3)
    z = jax.random.normal(kz, (batch, z_dim), dtype=jnp.float32)
    params = init_params(kp, z_dim, map_hidden_dim, map_output_dim)

    r_freqs, r_phases, r_codes = reference_forward(z, params)

    # 1) Exact-math check with f32 MXU operands.
    kparams32, meta = prepare_kernel_params(params, compute_dtype=jnp.float32)
    freqs, phases, codes = custom_mapping_network(z, kparams32, meta)
    jax.block_until_ready((freqs, phases, codes))
    np.testing.assert_allclose(np.asarray(freqs), np.asarray(r_freqs), rtol=1e-5, atol=1e-5)
    np.testing.assert_allclose(np.asarray(phases), np.asarray(r_phases), rtol=1e-5, atol=1e-5)
    np.testing.assert_allclose(np.asarray(codes), np.asarray(r_codes), rtol=1e-5, atol=1e-5)

    # 2) Production default: bf16 MXU operands (f32 accumulate / bias / LeakyReLU).
    kparams_bf16, meta = prepare_kernel_params(params)   # compute_dtype=bf16
    freqs_b, phases_b, codes_b = custom_mapping_network(z, kparams_bf16, meta)
    jax.block_until_ready((freqs_b, phases_b, codes_b))
    np.testing.assert_allclose(np.asarray(freqs_b), np.asarray(r_freqs), rtol=5e-2, atol=5e-2)
    np.testing.assert_allclose(np.asarray(phases_b), np.asarray(r_phases), rtol=5e-2, atol=5e-2)
    np.testing.assert_allclose(np.asarray(codes_b), np.asarray(r_codes), rtol=5e-2, atol=5e-2)

    assert freqs.shape == (batch, map_output_dim // 2)
    assert phases.shape == (batch, map_output_dim // 2)
    assert codes.shape == (batch, map_hidden_dim)

    print("KERNEL_OK")
</pallas_src>

<mosaic_0001>
module attributes {stable_mosaic.version = 11 : i64} {
  func.func @mapping_mlp_kernel(%arg0: i32, %arg1: memref<16x128xf32, #tpu.memory_space<vmem>>, %arg2: memref<128x128xf32, #tpu.memory_space<vmem>>, %arg3: memref<1x128xf32, #tpu.memory_space<vmem>>, %arg4: memref<128x128xf32, #tpu.memory_space<vmem>>, %arg5: memref<1x128xf32, #tpu.memory_space<vmem>>, %arg6: memref<128x128xf32, #tpu.memory_space<vmem>>, %arg7: memref<1x128xf32, #tpu.memory_space<vmem>>, %arg8: memref<128x256xf32, #tpu.memory_space<vmem>>, %arg9: memref<1x256xf32, #tpu.memory_space<vmem>>, %arg10: memref<16x64xf32, #tpu.memory_space<vmem>>, %arg11: memref<16x24xf32, #tpu.memory_space<vmem>>, %arg12: memref<16x24xf32, #tpu.memory_space<vmem>>) attributes {dimension_semantics = [#tpu.dimension_semantics<parallel>], iteration_bounds = array<i64: 1>, scalar_prefetch = 0 : i64, scratch_operands = 0 : i64, tpu.core_type = #tpu.core_type<tc>, window_params = [{transform_indices = @transform_0, window_bounds = array<i64: 16, 128>}, {pipeline_mode = #tpu.pipeline_mode<synchronous>, transform_indices = @transform_1, window_bounds = array<i64: 128, 128>}, {pipeline_mode = #tpu.pipeline_mode<synchronous>, transform_indices = @transform_2, window_bounds = array<i64: 1, 128>}, {pipeline_mode = #tpu.pipeline_mode<synchronous>, transform_indices = @transform_3, window_bounds = array<i64: 128, 128>}, {pipeline_mode = #tpu.pipeline_mode<synchronous>, transform_indices = @transform_4, window_bounds = array<i64: 1, 128>}, {pipeline_mode = #tpu.pipeline_mode<synchronous>, transform_indices = @transform_5, window_bounds = array<i64: 128, 128>}, {pipeline_mode = #tpu.pipeline_mode<synchronous>, transform_indices = @transform_6, window_bounds = array<i64: 1, 128>}, {pipeline_mode = #tpu.pipeline_mode<synchronous>, transform_indices = @transform_7, window_bounds = array<i64: 128, 256>}, {pipeline_mode = #tpu.pipeline_mode<synchronous>, transform_indices = @transform_8, window_bounds = array<i64: 1, 256>}, {transform_indices = @transform_9, window_bounds = array<i64: 16, 64>}, {transform_indices = @transform_10, window_bounds = array<i64: 16, 24>}, {transform_indices = @transform_11, window_bounds = array<i64: 16, 24>}]} {
    %c0 = arith.constant 0 : index
    %c0_0 = arith.constant 0 : index
    %0 = vector.load %arg1[%c0, %c0_0] : memref<16x128xf32, #tpu.memory_space<vmem>>, vector<16x128xf32>
    %c0_1 = arith.constant 0 : index
    %c0_2 = arith.constant 0 : index
    %1 = vector.load %arg2[%c0_1, %c0_2] : memref<128x128xf32, #tpu.memory_space<vmem>>, vector<128x128xf32>
    %cst = arith.constant dense<0.000000e+00> : vector<16x128xf32>
    %2 = tpu.matmul %0, %1, %cst {dimension_numbers = #tpu.dot_dimension_numbers<[1], [0], [0], [1], [0, 0, 1, 1], [], []>} : vector<16x128xf32>, vector<128x128xf32>, vector<16x128xf32> -> vector<16x128xf32>
    %c0_3 = arith.constant 0 : index
    %c0_4 = arith.constant 0 : index
    %3 = vector.load %arg3[%c0_3, %c0_4] : memref<1x128xf32, #tpu.memory_space<vmem>>, vector<1x128xf32>
    %4 = vector.broadcast %3 : vector<1x128xf32> to vector<16x128xf32>
    %5 = arith.addf %2, %4 : vector<16x128xf32>
    %cst_5 = arith.constant 0.000000e+00 : f32
    %6 = vector.broadcast %cst_5 : f32 to vector<16x128xf32>
    %7 = arith.cmpf oge, %5, %6 : vector<16x128xf32>
    %cst_6 = arith.constant 2.000000e-01 : f32
    %8 = vector.broadcast %cst_6 : f32 to vector<16x128xf32>
    %9 = arith.mulf %8, %5 : vector<16x128xf32>
    %10 = arith.select %7, %5, %9 : vector<16x128xi1>, vector<16x128xf32>
    %c0_7 = arith.constant 0 : index
    %c0_8 = arith.constant 0 : index
    %11 = vector.load %arg4[%c0_7, %c0_8] : memref<128x128xf32, #tpu.memory_space<vmem>>, vector<128x128xf32>
    %cst_9 = arith.constant dense<0.000000e+00> : vector<16x128xf32>
    %12 = tpu.matmul %10, %11, %cst_9 {dimension_numbers = #tpu.dot_dimension_numbers<[1], [0], [0], [1], [0, 0, 1, 1], [], []>} : vector<16x128xf32>, vector<128x128xf32>, vector<16x128xf32> -> vector<16x128xf32>
    %c0_10 = arith.constant 0 : index
    %c0_11 = arith.constant 0 : index
    %13 = vector.load %arg5[%c0_10, %c0_11] : memref<1x128xf32, #tpu.memory_space<vmem>>, vector<1x128xf32>
    %14 = vector.broadcast %13 : vector<1x128xf32> to vector<16x128xf32>
    %15 = arith.addf %12, %14 : vector<16x128xf32>
    %cst_12 = arith.constant 0.000000e+00 : f32
    %16 = vector.broadcast %cst_12 : f32 to vector<16x128xf32>
    %17 = arith.cmpf oge, %15, %16 : vector<16x128xf32>
    %cst_13 = arith.constant 2.000000e-01 : f32
    %18 = vector.broadcast %cst_13 : f32 to vector<16x128xf32>
    %19 = arith.mulf %18, %15 : vector<16x128xf32>
    %20 = arith.select %17, %15, %19 : vector<16x128xi1>, vector<16x128xf32>
    %c0_14 = arith.constant 0 : index
    %c0_15 = arith.constant 0 : index
    %21 = vector.load %arg6[%c0_14, %c0_15] : memref<128x128xf32, #tpu.memory_space<vmem>>, vector<128x128xf32>
    %cst_16 = arith.constant dense<0.000000e+00> : vector<16x128xf32>
    %22 = tpu.matmul %20, %21, %cst_16 {dimension_numbers = #tpu.dot_dimension_numbers<[1], [0], [0], [1], [0, 0, 1, 1], [], []>} : vector<16x128xf32>, vector<128x128xf32>, vector<16x128xf32> -> vector<16x128xf32>
    %c0_17 = arith.constant 0 : index
    %c0_18 = arith.constant 0 : index
    %23 = vector.load %arg7[%c0_17, %c0_18] : memref<1x128xf32, #tpu.memory_space<vmem>>, vector<1x128xf32>
    %24 = vector.broadcast %23 : vector<1x128xf32> to vector<16x128xf32>
    %25 = arith.addf %22, %24 : vector<16x128xf32>
    %cst_19 = arith.constant 0.000000e+00 : f32
    %26 = vector.broadcast %cst_19 : f32 to vector<16x128xf32>
    %27 = arith.cmpf oge, %25, %26 : vector<16x128xf32>
    %cst_20 = arith.constant 2.000000e-01 : f32
    %28 = vector.broadcast %cst_20 : f32 to vector<16x128xf32>
    %29 = arith.mulf %28, %25 : vector<16x128xf32>
    %30 = arith.select %27, %25, %29 : vector<16x128xi1>, vector<16x128xf32>
    %31 = vector.extract_strided_slice %30 {offsets = [0, 0], sizes = [16, 64], strides = [1, 1]} : vector<16x128xf32> to vector<16x64xf32>
    %c0_21 = arith.constant 0 : index
    %c0_22 = arith.constant 0 : index
    %32 = vector.load %arg10[%c0_21, %c0_22] : memref<16x64xf32, #tpu.memory_space<vmem>>, vector<16x64xf32>
    tpu.vector_store %arg10[%c0_21, %c0_22], %31 {strides = array<i32>} : memref<16x64xf32, #tpu.memory_space<vmem>>, vector<16x64xf32>,
    %c0_23 = arith.constant 0 : index
    %c0_24 = arith.constant 0 : index
    %33 = vector.load %arg8[%c0_23, %c0_24] : memref<128x256xf32, #tpu.memory_space<vmem>>, vector<128x256xf32>
    %cst_25 = arith.constant dense<0.000000e+00> : vector<16x256xf32>
    %34 = tpu.matmul %30, %33, %cst_25 {dimension_numbers = #tpu.dot_dimension_numbers<[1], [0], [0], [1], [0, 0, 1, 1], [], []>} : vector<16x128xf32>, vector<128x256xf32>, vector<16x256xf32> -> vector<16x256xf32>
    %c0_26 = arith.constant 0 : index
    %c0_27 = arith.constant 0 : index
    %35 = vector.load %arg9[%c0_26, %c0_27] : memref<1x256xf32, #tpu.memory_space<vmem>>, vector<1x256xf32>
    %36 = vector.broadcast %35 : vector<1x256xf32> to vector<16x256xf32>
    %37 = arith.addf %34, %36 : vector<16x256xf32>
    %38 = vector.extract_strided_slice %37 {offsets = [0, 0], sizes = [16, 24], strides = [1, 1]} : vector<16x256xf32> to vector<16x24xf32>
    %c0_28 = arith.constant 0 : index
    %c0_29 = arith.constant 0 : index
    %39 = vector.load %arg11[%c0_28, %c0_29] : memref<16x24xf32, #tpu.memory_space<vmem>>, vector<16x24xf32>
    tpu.vector_store %arg11[%c0_28, %c0_29], %38 {strides = array<i32>} : memref<16x24xf32, #tpu.memory_space<vmem>>, vector<16x24xf32>,
    %40 = vector.extract_strided_slice %37 {offsets = [0, 128], sizes = [16, 24], strides = [1, 1]} : vector<16x256xf32> to vector<16x24xf32>
    %c0_30 = arith.constant 0 : index
    %c0_31 = arith.constant 0 : index
    %41 = vector.load %arg12[%c0_30, %c0_31] : memref<16x24xf32, #tpu.memory_space<vmem>>, vector<16x24xf32>
    tpu.vector_store %arg12[%c0_30, %c0_31], %40 {strides = array<i32>} : memref<16x24xf32, #tpu.memory_space<vmem>>, vector<16x24xf32>,
    return
  }
  func.func @transform_0(%arg0: i32) -> (i32, i32) {
    %c0_i32 = arith.constant 0 : i32
    %c0_i32_0 = arith.constant 0 : i32
    return %arg0, %c0_i32 : i32, i32
  }
  func.func @transform_1(%arg0: i32) -> (i32, i32) {
    %c0_i32 = arith.constant 0 : i32
    %c0_i32_0 = arith.constant 0 : i32
    %c0_i32_1 = arith.constant 0 : i32
    return %c0_i32, %c0_i32_0 : i32, i32
  }
  func.func @transform_2(%arg0: i32) -> (i32, i32) {
    %c0_i32 = arith.constant 0 : i32
    %c0_i32_0 = arith.constant 0 : i32
    %c0_i32_1 = arith.constant 0 : i32
    return %c0_i32, %c0_i32_0 : i32, i32
  }
  func.func @transform_3(%arg0: i32) -> (i32, i32) {
    %c0_i32 = arith.constant 0 : i32
    %c0_i32_0 = arith.constant 0 : i32
    %c0_i32_1 = arith.constant 0 : i32
    return %c0_i32, %c0_i32_0 : i32, i32
  }
  func.func @transform_4(%arg0: i32) -> (i32, i32) {
    %c0_i32 = arith.constant 0 : i32
    %c0_i32_0 = arith.constant 0 : i32
    %c0_i32_1 = arith.constant 0 : i32
    return %c0_i32, %c0_i32_0 : i32, i32
  }
  func.func @transform_5(%arg0: i32) -> (i32, i32) {
    %c0_i32 = arith.constant 0 : i32
    %c0_i32_0 = arith.constant 0 : i32
    %c0_i32_1 = arith.constant 0 : i32
    return %c0_i32, %c0_i32_0 : i32, i32
  }
  func.func @transform_6(%arg0: i32) -> (i32, i32) {
    %c0_i32 = arith.constant 0 : i32
    %c0_i32_0 = arith.constant 0 : i32
    %c0_i32_1 = arith.constant 0 : i32
    return %c0_i32, %c0_i32_0 : i32, i32
  }
  func.func @transform_7(%arg0: i32) -> (i32, i32) {
    %c0_i32 = arith.constant 0 : i32
    %c0_i32_0 = arith.constant 0 : i32
    %c0_i32_1 = arith.constant 0 : i32
    return %c0_i32, %c0_i32_0 : i32, i32
  }
  func.func @transform_8(%arg0: i32) -> (i32, i32) {
    %c0_i32 = arith.constant 0 : i32
    %c0_i32_0 = arith.constant 0 : i32
    %c0_i32_1 = arith.constant 0 : i32
    return %c0_i32, %c0_i32_0 : i32, i32
  }
  func.func @transform_9(%arg0: i32) -> (i32, i32) {
    %c0_i32 = arith.constant 0 : i32
    %c0_i32_0 = arith.constant 0 : i32
    return %arg0, %c0_i32 : i32, i32
  }
  func.func @transform_10(%arg0: i32) -> (i32, i32) {
    %c0_i32 = arith.constant 0 : i32
    %c0_i32_0 = arith.constant 0 : i32
    return %arg0, %c0_i32 : i32, i32
  }
  func.func @transform_11(%arg0: i32) -> (i32, i32) {
    %c0_i32 = arith.constant 0 : i32
    %c0_i32_0 = arith.constant 0 : i32
    return %arg0, %c0_i32 : i32, i32
  }
}

</mosaic_0001>

<llo_original>
// kernel: tpu_custom_call.1
$region0: #{tpu_custom_call.1}
  #allocation0 [shape = 'u32[]', space=smem, size = 0x4, offset = 0x4, fixed_abs, tag = 'smem constant byte address 0x4 - core index']
  #allocation1 [shape = 'u32[144,128]{1,0:T(1,128)}', space=vmem, size = 0x12000, scoped, tag = 'internal scratch']
  %s0 = inlined_call_operand.hbm [shape: f32[16,128], index: 0, kind: input, shape index: {}]
  %s1 = inlined_call_operand.hbm [shape: f32[128,128], index: 1, kind: input, shape index: {}]
  %s2 = inlined_call_operand.vmem [shape: f32[1,128], index: 2, kind: input, shape index: {}]
  %s3 = inlined_call_operand.hbm [shape: f32[128,128], index: 3, kind: input, shape index: {}]
  %s4 = inlined_call_operand.vmem [shape: f32[1,128], index: 4, kind: input, shape index: {}]
  %s5 = inlined_call_operand.hbm [shape: f32[128,128], index: 5, kind: input, shape index: {}]
  %s6 = inlined_call_operand.vmem [shape: f32[1,128], index: 6, kind: input, shape index: {}]
  %s7 = inlined_call_operand.hbm [shape: f32[128,256], index: 7, kind: input, shape index: {}]
  %s8 = inlined_call_operand.vmem [shape: f32[1,256], index: 8, kind: input, shape index: {}]
  %s9 = inlined_call_operand.hbm [shape: f32[16,64], index: 9, kind: output, shape index: {0}]
  %s10 = inlined_call_operand.hbm [shape: f32[16,24], index: 10, kind: output, shape index: {1}]
  %s11 = inlined_call_operand.hbm [shape: f32[16,24], index: 11, kind: output, shape index: {2}]
  %12 = xla_tuple %s9, %s10, %s11
  %s13 = sld [smem:[#allocation0]]
  $region82: #{tpu_custom_call.1} parent=0
    _
  %s15 = ssub.s32 1, %s13
  %s16 = scalar_select 0, %s15, %s13
  $region1: #{tpu_custom_call.1} parent=0
    #allocation2 [shape = 'u8[8192]{0}', space=vmem, size = 0x2000, scoped, tag = 'input window, operand 0, single buffered']
    #allocation3 [shape = 's32[1]{0}', space=sflag, size = 0x4, scoped, tag = 'scoped memory for tpu_custom_call.1']
    #allocation4 [shape = 's32[1]{0}', space=sflag, size = 0x4, scoped, tag = 'scoped memory for tpu_custom_call.1']
    #allocation5 [shape = 'u8[65536]{0}', space=vmem, size = 0x10000, scoped, tag = 'input window, operand 1, single buffered']
    #allocation6 [shape = 's32[1]{0}', space=sflag, size = 0x4, scoped, tag = 'scoped memory for tpu_custom_call.1']
    #allocation7 [shape = 'u8[65536]{0}', space=vmem, size = 0x10000, scoped, tag = 'input window, operand 3, single buffered']
    #allocation8 [shape = 'u8[65536]{0}', space=vmem, size = 0x10000, scoped, tag = 'input window, operand 5, single buffered']
    #allocation9 [shape = 's32[1]{0}', space=sflag, size = 0x4, scoped, tag = 'scoped memory for tpu_custom_call.1']
    #allocation10 [shape = 'u8[131072]{0}', space=vmem, size = 0x20000, scoped, tag = 'input window, operand 7, single buffered']
    #allocation11 [shape = 'u8[8192]{0}', space=vmem, size = 0x2000, scoped, tag = 'output window, operand 0, single buffered']
    #allocation12 [shape = 'u8[8192]{0}', space=vmem, size = 0x2000, scoped, tag = 'output window, operand 1, single buffered']
    #allocation13 [shape = 's32[1]{0}', space=sflag, size = 0x4, scoped, tag = 'scoped memory for tpu_custom_call.1']
    #allocation14 [shape = 'u8[8192]{0}', space=vmem, size = 0x2000, scoped, tag = 'output window, operand 2, single buffered']
    %17 = vsyncpa [#allocation3], 0
    %18 = vsyncpa [#allocation6], 0
    %19 = vsyncpa [#allocation9], 0
    %20 = vsyncpa [#allocation4], 0
    %21 = vsyncpa [#allocation13], 0
    // Predicated region
    $region2: #{tpu_custom_call.1} parent=1 // pred_check
      _
    $region3: #{tpu_custom_call.1} parent=1 // pred_check_branch
      %23 = sbr.rel (0) target = $region5
    $region4: #{tpu_custom_call.1} parent=1 // pred_region
      %s25 = ssub.s32 256, 256
      %26 = vsyncadd [#allocation3], %s25
      %s27 = sshll.u32 [#allocation2], 4
      %s28 = int_to_ptr.vmem [resolvable:$true] %s27
      %33 = dma.hbm_to_vmem [thread:$0]  %s0, 256, %s28, [#allocation3], 128, 128, 8
    $region5: #{tpu_custom_call.1} parent=1 // pred_fallthru
      _
    // Predicated region
    $region6: #{tpu_custom_call.1} parent=1 // pred_check
      _
    $region7: #{tpu_custom_call.1} parent=1 // pred_check_branch
      %35 = sbr.rel (0) target = $region9
    $region8: #{tpu_custom_call.1} parent=1 // pred_region
      %s37 = ssub.s32 2048, 2048
      %38 = vsyncadd [#allocation6], %s37
      %s39 = sshll.u32 [#allocation5], 4
      %s40 = int_to_ptr.vmem [resolvable:$true] %s39
      %45 = dma.hbm_to_vmem [thread:$0]  %s1, 2048, %s40, [#allocation6], 128, 128, 8
    $region9: #{tpu_custom_call.1} parent=1 // pred_fallthru
      _
    // Predicated region
    $region10: #{tpu_custom_call.1} parent=1 // pred_check
      _
    $region11: #{tpu_custom_call.1} parent=1 // pred_check_branch
      %47 = sbr.rel (0) target = $region13
    $region12: #{tpu_custom_call.1} parent=1 // pred_region
      _
    $region13: #{tpu_custom_call.1} parent=1 // pred_fallthru
      _
    // Predicated region
    $region14: #{tpu_custom_call.1} parent=1 // pred_check
      _
    $region15: #{tpu_custom_call.1} parent=1 // pred_check_branch
      %49 = sbr.rel (0) target = $region17
    $region16: #{tpu_custom_call.1} parent=1 // pred_region
      %s51 = ssub.s32 2048, 2048
      %52 = vsyncadd [#allocation6], %s51
      %s53 = sshll.u32 [#allocation7], 4
      %s54 = int_to_ptr.vmem [resolvable:$true] %s53
      %59 = dma.hbm_to_vmem [thread:$0]  %s3, 2048, %s54, [#allocation6], 128, 128, 8
    $region17: #{tpu_custom_call.1} parent=1 // pred_fallthru
      _
    // Predicated region
    $region18: #{tpu_custom_call.1} parent=1 // pred_check
      _
    $region19: #{tpu_custom_call.1} parent=1 // pred_check_branch
      %61 = sbr.rel (0) target = $region21
    $region20: #{tpu_custom_call.1} parent=1 // pred_region
      _
    $region21: #{tpu_custom_call.1} parent=1 // pred_fallthru
      _
    // Predicated region
    $region22: #{tpu_custom_call.1} parent=1 // pred_check
      _
    $region23: #{tpu_custom_call.1} parent=1 // pred_check_branch
      %63 = sbr.rel (0) target = $region25
    $region24: #{tpu_custom_call.1} parent=1 // pred_region
      %s65 = ssub.s32 2048, 2048
      %66 = vsyncadd [#allocation9], %s65
      %s67 = sshll.u32 [#allocation8], 4
      %s68 = int_to_ptr.vmem [resolvable:$true] %s67
      %73 = dma.hbm_to_vmem [thread:$0]  %s5, 2048, %s68, [#allocation9], 128, 128, 8
    $region25: #{tpu_custom_call.1} parent=1 // pred_fallthru
      _
    // Predicated region
    $region26: #{tpu_custom_call.1} parent=1 // pred_check
      _
    $region27: #{tpu_custom_call.1} parent=1 // pred_check_branch
      %75 = sbr.rel (0) target = $region29
    $region28: #{tpu_custom_call.1} parent=1 // pred_region
      _
    $region29: #{tpu_custom_call.1} parent=1 // pred_fallthru
      _
    // Predicated region
    $region30: #{tpu_custom_call.1} parent=1 // pred_check
      _
    $region31: #{tpu_custom_call.1} parent=1 // pred_check_branch
      %77 = sbr.rel (0) target = $region33
    $region32: #{tpu_custom_call.1} parent=1 // pred_region
      %s79 = ssub.s32 4096, 4096
      %80 = vsyncadd [#allocation9], %s79
      %s81 = sshll.u32 [#allocation10], 4
      %s82 = int_to_ptr.vmem [resolvable:$true] %s81
      %87 = dma.hbm_to_vmem [thread:$0]  %s7, 4096, %s82, [#allocation9], 256, 256, 16
    $region33: #{tpu_custom_call.1} parent=1 // pred_fallthru
      _
    // Predicated region
    $region34: #{tpu_custom_call.1} parent=1 // pred_check
      _
    $region35: #{tpu_custom_call.1} parent=1 // pred_check_branch
      %89 = sbr.rel (0) target = $region37
    $region36: #{tpu_custom_call.1} parent=1 // pred_region
      _
    $region37: #{tpu_custom_call.1} parent=1 // pred_fallthru
      _
    // Predicated region
    $region38: #{tpu_custom_call.1} parent=1 // pred_check
      _
    $region39: #{tpu_custom_call.1} parent=1 // pred_check_branch
      %91 = sbr.rel (0) target = $region41
    $region40: #{tpu_custom_call.1} parent=1 // pred_region
      %92 = dma.done [#allocation3], 256
    $region41: #{tpu_custom_call.1} parent=1 // pred_fallthru
      _
    // Predicated region
    $region42: #{tpu_custom_call.1} parent=1 // pred_check
      _
    $region43: #{tpu_custom_call.1} parent=1 // pred_check_branch
      %94 = sbr.rel (0) target = $region45
    $region44: #{tpu_custom_call.1} parent=1 // pred_region
      %95 = dma.done [#allocation6], 2048
    $region45: #{tpu_custom_call.1} parent=1 // pred_fallthru
      _
    // Predicated region
    $region46: #{tpu_custom_call.1} parent=1 // pred_check
      _
    $region47: #{tpu_custom_call.1} parent=1 // pred_check_branch
      %97 = sbr.rel (0) target = $region49
    $region48: #{tpu_custom_call.1} parent=1 // pred_region
      %98 = dma.done [#allocation6], 2048
    $region49: #{tpu_custom_call.1} parent=1 // pred_fallthru
      _
    // Predicated region
    $region50: #{tpu_custom_call.1} parent=1 // pred_check
      _
    $region51: #{tpu_custom_call.1} parent=1 // pred_check_branch
      %100 = sbr.rel (0) target = $region53
    $region52: #{tpu_custom_call.1} parent=1 // pred_region
      %101 = dma.done [#allocation9], 2048
    $region53: #{tpu_custom_call.1} parent=1 // pred_fallthru
      _
    // Predicated region
    $region54: #{tpu_custom_call.1} parent=1 // pred_check
      _
    $region55: #{tpu_custom_call.1} parent=1 // pred_check_branch
      %103 = sbr.rel (0) target = $region57
    $region56: #{tpu_custom_call.1} parent=1 // pred_region
      %104 = dma.done [#allocation9], 4096
    $region57: #{tpu_custom_call.1} parent=1 // pred_fallthru
      _
    %v105 = vld [vmem:[#allocation2] sm:$0xff]
    %v106 = vld [vmem:[#allocation2 + $0x8] sm:$0xff]
    %v107 = vld [vmem:[#allocation5] sm:$0xff]
    %v108 = vld [vmem:[#allocation5 + $0x8] sm:$0xff]
    %v109 = vld [vmem:[#allocation5 + $0x10] sm:$0xff]
    %v110 = vld [vmem:[#allocation5 + $0x18] sm:$0xff]
    %v111 = vld [vmem:[#allocation5 + $0x20] sm:$0xff]
    %v112 = vld [vmem:[#allocation5 + $0x28] sm:$0xff]
    %v113 = vld [vmem:[#allocation5 + $0x30] sm:$0xff]
    %v114 = vld [vmem:[#allocation5 + $0x38] sm:$0xff]
    %v115 = vld [vmem:[#allocation5 + $0x40] sm:$0xff]
    %v116 = vld [vmem:[#allocation5 + $0x48] sm:$0xff]
    %v117 = vld [vmem:[#allocation5 + $0x50] sm:$0xff]
    %v118 = vld [vmem:[#allocation5 + $0x58] sm:$0xff]
    %v119 = vld [vmem:[#allocation5 + $0x60] sm:$0xff]
    %v120 = vld [vmem:[#allocation5 + $0x68] sm:$0xff]
    %v121 = vld [vmem:[#allocation5 + $0x70] sm:$0xff]
    %v122 = vld [vmem:[#allocation5 + $0x78] sm:$0xff]
    %v123 = vld [vmem:[%s2] sm:$0x1]
    %v125 = vlaneseq
    %v126 = vshrl.u32 %v125, 7
    %v127 = vsub.s32 0, %v126
    %v128 = vrot.slane %v123, %v127
    %130 = vmatprep.subr.mxu0 0.0
    %131 = vmatpush1.msra.mxu0 %v122
    %132 = vmatprep.subr.mxu0 0.0
    %133 = vmatpush1.msra.mxu0 %v121
    %134 = vmatprep.subr.mxu0 0.0
    %135 = vmatpush1.msra.mxu0 %v120
    %136 = vmatprep.subr.mxu0 0.0
    %137 = vmatpush1.msra.mxu0 %v119
    %138 = vmatprep.subr.mxu0 0.0
    %139 = vmatpush1.msra.mxu0 %v118
    %140 = vmatprep.subr.mxu0 0.0
    %141 = vmatpush1.msra.mxu0 %v117
    %142 = vmatprep.subr.mxu0 0.0
    %143 = vmatpush1.msra.mxu0 %v116
    %144 = vmatprep.subr.mxu0 0.0
    %145 = vmatpush1.msra.mxu0 %v115
    %146 = vmatprep.subr.mxu0 0.0
    %147 = vmatpush1.msra.mxu0 %v114
    %148 = vmatprep.subr.mxu0 0.0
    %149 = vmatpush1.msra.mxu0 %v113
    %150 = vmatprep.subr.mxu0 0.0
    %151 = vmatpush1.msra.mxu0 %v112
    %152 = vmatprep.subr.mxu0 0.0
    %153 = vmatpush1.msra.mxu0 %v111
    %154 = vmatprep.subr.mxu0 0.0
    %155 = vmatpush1.msra.mxu0 %v110
    %156 = vmatprep.subr.mxu0 0.0
    %157 = vmatpush1.msra.mxu0 %v109
    %158 = vmatprep.subr.mxu0 0.0
    %159 = vmatpush1.msra.mxu0 %v108
    %160 = vmatprep.subr.mxu0 0.0
    %161 = vmatpush1.msra.mxu0 %v107
    %162 = vmatprep.subr.mxu0 0.0
    %163 = vmatpush2.msra.mxu0 0.0
    %164 = vmatprep.subr.mxu0 0.0
    %165 = vmatpush2.msra.mxu0 0.0
    %166 = vmatprep.subr.mxu0 0.0
    %167 = vmatpush2.msra.mxu0 0.0
    %168 = vmatprep.subr.mxu0 0.0
    %169 = vmatpush2.msra.mxu0 0.0
    %170 = vmatprep.subr.mxu0 0.0
    %171 = vmatpush2.msra.mxu0 0.0
    %172 = vmatprep.subr.mxu0 0.0
    %173 = vmatpush2.msra.mxu0 0.0
    %174 = vmatprep.subr.mxu0 0.0
    %175 = vmatpush2.msra.mxu0 0.0
    %176 = vmatprep.subr.mxu0 0.0
    %177 = vmatpush2.msra.mxu0 0.0
    %178 = vmatprep.subr.mxu0 0.0
    %179 = vmatpush2.msra.mxu0 0.0
    %180 = vmatprep.subr.mxu0 0.0
    %181 = vmatpush2.msra.mxu0 0.0
    %182 = vmatprep.subr.mxu0 0.0
    %183 = vmatpush2.msra.mxu0 0.0
    %184 = vmatprep.subr.mxu0 0.0
    %185 = vmatpush2.msra.mxu0 0.0
    %186 = vmatprep.subr.mxu0 0.0
    %187 = vmatpush2.msra.mxu0 0.0
    %188 = vmatprep.subr.mxu0 0.0
    %189 = vmatpush2.msra.mxu0 0.0
    %190 = vmatprep.subr.mxu0 0.0
    %191 = vmatpush2.msra.mxu0 0.0
    %192 = vmatprep.subr.mxu0 0.0
    %193 = vmatpush2.msra.mxu0 0.0
    %194 = vmatprep.mubr.f32.mxu0 0.0
    %195 = vmatmul.mubr.f32.gmra.mxu0 %v105
    %v196 = vpop.f32.mrf.mxu0
    %v197 = vadd.f32 %v128, %v196
    %v198 = vpop.f32.mrf.mxu0
    %199 = vmatprep.mubr.f32.mxu0 0.0
    %200 = vmatmul.mubr.f32.gmra.mxu0 %v106
    %v201 = vpop.f32.mrf.mxu0
    %v202 = vadd.f32 %v128, %v201
    %v203 = vpop.f32.mrf.mxu0
    %204 = vdwg.mxu0
    %vm205 = vcmp.ge.f32.partialorder %v197, 0.0
    %vm206 = vcmp.ge.f32.partialorder %v202, 0.0
    %v207 = vmul.f32 %v197, 0.2
    %v208 = vmul.f32 %v202, 0.2
    %v209 = vsel %vm205, %v197, %v207
    %v210 = vsel %vm206, %v202, %v208
    %v211 = vld [vmem:[#allocation7] sm:$0xff]
    %v212 = vld [vmem:[#allocation7 + $0x8] sm:$0xff]
    %v213 = vld [vmem:[#allocation7 + $0x10] sm:$0xff]
    %v214 = vld [vmem:[#allocation7 + $0x18] sm:$0xff]
    %v215 = vld [vmem:[#allocation7 + $0x20] sm:$0xff]
    %v216 = vld [vmem:[#allocation7 + $0x28] sm:$0xff]
    %v217 = vld [vmem:[#allocation7 + $0x30] sm:$0xff]
    %v218 = vld [vmem:[#allocation7 + $0x38] sm:$0xff]
    %v219 = vld [vmem:[#allocation7 + $0x40] sm:$0xff]
    %v220 = vld [vmem:[#allocation7 + $0x48] sm:$0xff]
    %v221 = vld [vmem:[#allocation7 + $0x50] sm:$0xff]
    %v222 = vld [vmem:[#allocation7 + $0x58] sm:$0xff]
    %v223 = vld [vmem:[#allocation7 + $0x60] sm:$0xff]
    %v224 = vld [vmem:[#allocation7 + $0x68] sm:$0xff]
    %v225 = vld [vmem:[#allocation7 + $0x70] sm:$0xff]
    %v226 = vld [vmem:[#allocation7 + $0x78] sm:$0xff]
    %v227 = vld [vmem:[%s4] sm:$0x1]
    %v229 = vlaneseq
    %v230 = vshrl.u32 %v229, 7
    %v231 = vsub.s32 0, %v230
    %v232 = vrot.slane %v227, %v231
    %234 = vmatprep.subr.mxu0 0.0
    %235 = vmatpush1.msra.mxu0 %v226
    %236 = vmatprep.subr.mxu0 0.0
    %237 = vmatpush1.msra.mxu0 %v225
    %238 = vmatprep.subr.mxu0 0.0
    %239 = vmatpush1.msra.mxu0 %v224
    %240 = vmatprep.subr.mxu0 0.0
    %241 = vmatpush1.msra.mxu0 %v223
    %242 = vmatprep.subr.mxu0 0.0
    %243 = vmatpush1.msra.mxu0 %v222
    %244 = vmatprep.subr.mxu0 0.0
    %245 = vmatpush1.msra.mxu0 %v221
    %246 = vmatprep.subr.mxu0 0.0
    %247 = vmatpush1.msra.mxu0 %v220
    %248 = vmatprep.subr.mxu0 0.0
    %249 = vmatpush1.msra.mxu0 %v219
    %250 = vmatprep.subr.mxu0 0.0
    %251 = vmatpush1.msra.mxu0 %v218
    %252 = vmatprep.subr.mxu0 0.0
    %253 = vmatpush1.msra.mxu0 %v217
    %254 = vmatprep.subr.mxu0 0.0
    %255 = vmatpush1.msra.mxu0 %v216
    %256 = vmatprep.subr.mxu0 0.0
    %257 = vmatpush1.msra.mxu0 %v215
    %258 = vmatprep.subr.mxu0 0.0
    %259 = vmatpush1.msra.mxu0 %v214
    %260 = vmatprep.subr.mxu0 0.0
    %261 = vmatpush1.msra.mxu0 %v213
    %262 = vmatprep.subr.mxu0 0.0
    %263 = vmatpush1.msra.mxu0 %v212
    %264 = vmatprep.subr.mxu0 0.0
    %265 = vmatpush1.msra.mxu0 %v211
    %266 = vmatprep.subr.mxu0 0.0
    %267 = vmatpush2.msra.mxu0 0.0
    %268 = vmatprep.subr.mxu0 0.0
    %269 = vmatpush2.msra.mxu0 0.0
    %270 = vmatprep.subr.mxu0 0.0
    %271 = vmatpush2.msra.mxu0 0.0
    %272 = vmatprep.subr.mxu0 0.0
    %273 = vmatpush2.msra.mxu0 0.0
    %274 = vmatprep.subr.mxu0 0.0
    %275 = vmatpush2.msra.mxu0 0.0
    %276 = vmatprep.subr.mxu0 0.0
    %277 = vmatpush2.msra.mxu0 0.0
    %278 = vmatprep.subr.mxu0 0.0
    %279 = vmatpush2.msra.mxu0 0.0
    %280 = vmatprep.subr.mxu0 0.0
    %281 = vmatpush2.msra.mxu0 0.0
    %282 = vmatprep.subr.mxu0 0.0
    %283 = vmatpush2.msra.mxu0 0.0
    %284 = vmatprep.subr.mxu0 0.0
    %285 = vmatpush2.msra.mxu0 0.0
    %286 = vmatprep.subr.mxu0 0.0
    %287 = vmatpush2.msra.mxu0 0.0
    %288 = vmatprep.subr.mxu0 0.0
    %289 = vmatpush2.msra.mxu0 0.0
    %290 = vmatprep.subr.mxu0 0.0
    %291 = vmatpush2.msra.mxu0 0.0
    %292 = vmatprep.subr.mxu0 0.0
    %293 = vmatpush2.msra.mxu0 0.0
    %294 = vmatprep.subr.mxu0 0.0
    %295 = vmatpush2.msra.mxu0 0.0
    %296 = vmatprep.subr.mxu0 0.0
    %297 = vmatpush2.msra.mxu0 0.0
    %298 = vmatprep.mubr.f32.mxu0 0.0
    %299 = vmatmul.mubr.f32.gmra.mxu0 %v209
    %v300 = vpop.f32.mrf.mxu0
    %v301 = vadd.f32 %v232, %v300
    %v302 = vpop.f32.mrf.mxu0
    %303 = vmatprep.mubr.f32.mxu0 0.0
    %304 = vmatmul.mubr.f32.gmra.mxu0 %v210
    %v305 = vpop.f32.mrf.mxu0
    %v306 = vadd.f32 %v232, %v305
    %v307 = vpop.f32.mrf.mxu0
    %308 = vdwg.mxu0
    %vm309 = vcmp.ge.f32.partialorder %v301, 0.0
    %vm310 = vcmp.ge.f32.partialorder %v306, 0.0
    %v311 = vmul.f32 %v301, 0.2
    %v312 = vmul.f32 %v306, 0.2
    %v313 = vsel %vm309, %v301, %v311
    %v314 = vsel %vm310, %v306, %v312
    %v315 = vld [vmem:[#allocation8] sm:$0xff]
    %v316 = vld [vmem:[#allocation8 + $0x8] sm:$0xff]
    %v317 = vld [vmem:[#allocation8 + $0x10] sm:$0xff]
    %v318 = vld [vmem:[#allocation8 + $0x18] sm:$0xff]
    %v319 = vld [vmem:[#allocation8 + $0x20] sm:$0xff]
    %v320 = vld [vmem:[#allocation8 + $0x28] sm:$0xff]
    %v321 = vld [vmem:[#allocation8 + $0x30] sm:$0xff]
    %v322 = vld [vmem:[#allocation8 + $0x38] sm:$0xff]
    %v323 = vld [vmem:[#allocation8 + $0x40] sm:$0xff]
    %v324 = vld [vmem:[#allocation8 + $0x48] sm:$0xff]
    %v325 = vld [vmem:[#allocation8 + $0x50] sm:$0xff]
    %v326 = vld [vmem:[#allocation8 + $0x58] sm:$0xff]
    %v327 = vld [vmem:[#allocation8 + $0x60] sm:$0xff]
    %v328 = vld [vmem:[#allocation8 + $0x68] sm:$0xff]
    %v329 = vld [vmem:[#allocation8 + $0x70] sm:$0xff]
    %v330 = vld [vmem:[#allocation8 + $0x78] sm:$0xff]
    %v331 = vld [vmem:[%s6] sm:$0x1]
    %v333 = vlaneseq
    %v334 = vshrl.u32 %v333, 7
    %v335 = vsub.s32 0, %v334
    %v336 = vrot.slane %v331, %v335
    %338 = vmatprep.subr.mxu0 0.0
    %339 = vmatpush1.msra.mxu0 %v330
    %340 = vmatprep.subr.mxu0 0.0
    %341 = vmatpush1.msra.mxu0 %v329
    %342 = vmatprep.subr.mxu0 0.0
    %343 = vmatpush1.msra.mxu0 %v328
    %344 = vmatprep.subr.mxu0 0.0
    %345 = vmatpush1.msra.mxu0 %v327
    %346 = vmatprep.subr.mxu0 0.0
    %347 = vmatpush1.msra.mxu0 %v326
    %348 = vmatprep.subr.mxu0 0.0
    %349 = vmatpush1.msra.mxu0 %v325
    %350 = vmatprep.subr.mxu0 0.0
    %351 = vmatpush1.msra.mxu0 %v324
    %352 = vmatprep.subr.mxu0 0.0
    %353 = vmatpush1.msra.mxu0 %v323
    %354 = vmatprep.subr.mxu0 0.0
    %355 = vmatpush1.msra.mxu0 %v322
    %356 = vmatprep.subr.mxu0 0.0
    %357 = vmatpush1.msra.mxu0 %v321
    %358 = vmatprep.subr.mxu0 0.0
    %359 = vmatpush1.msra.mxu0 %v320
    %360 = vmatprep.subr.mxu0 0.0
    %361 = vmatpush1.msra.mxu0 %v319
    %362 = vmatprep.subr.mxu0 0.0
    %363 = vmatpush1.msra.mxu0 %v318
    %364 = vmatprep.subr.mxu0 0.0
    %365 = vmatpush1.msra.mxu0 %v317
    %366 = vmatprep.subr.mxu0 0.0
    %367 = vmatpush1.msra.mxu0 %v316
    %368 = vmatprep.subr.mxu0 0.0
    %369 = vmatpush1.msra.mxu0 %v315
    %370 = vmatprep.subr.mxu0 0.0
    %371 = vmatpush2.msra.mxu0 0.0
    %372 = vmatprep.subr.mxu0 0.0
    %373 = vmatpush2.msra.mxu0 0.0
    %374 = vmatprep.subr.mxu0 0.0
    %375 = vmatpush2.msra.mxu0 0.0
    %376 = vmatprep.subr.mxu0 0.0
    %377 = vmatpush2.msra.mxu0 0.0
    %378 = vmatprep.subr.mxu0 0.0
    %379 = vmatpush2.msra.mxu0 0.0
    %380 = vmatprep.subr.mxu0 0.0
    %381 = vmatpush2.msra.mxu0 0.0
    %382 = vmatprep.subr.mxu0 0.0
    %383 = vmatpush2.msra.mxu0 0.0
    %384 = vmatprep.subr.mxu0 0.0
    %385 = vmatpush2.msra.mxu0 0.0
    %386 = vmatprep.subr.mxu0 0.0
    %387 = vmatpush2.msra.mxu0 0.0
    %388 = vmatprep.subr.mxu0 0.0
    %389 = vmatpush2.msra.mxu0 0.0
    %390 = vmatprep.subr.mxu0 0.0
    %391 = vmatpush2.msra.mxu0 0.0
    %392 = vmatprep.subr.mxu0 0.0
    %393 = vmatpush2.msra.mxu0 0.0
    %394 = vmatprep.subr.mxu0 0.0
    %395 = vmatpush2.msra.mxu0 0.0
    %396 = vmatprep.subr.mxu0 0.0
    %397 = vmatpush2.msra.mxu0 0.0
    %398 = vmatprep.subr.mxu0 0.0
    %399 = vmatpush2.msra.mxu0 0.0
    %400 = vmatprep.subr.mxu0 0.0
    %401 = vmatpush2.msra.mxu0 0.0
    %402 = vmatprep.mubr.f32.mxu0 0.0
    %403 = vmatmul.mubr.f32.gmra.mxu0 %v313
    %v404 = vpop.f32.mrf.mxu0
    %v405 = vadd.f32 %v336, %v404
    %v406 = vpop.f32.mrf.mxu0
    %407 = vmatprep.mubr.f32.mxu0 0.0
    %408 = vmatmul.mubr.f32.gmra.mxu0 %v314
    %v409 = vpop.f32.mrf.mxu0
    %v410 = vadd.f32 %v336, %v409
    %v411 = vpop.f32.mrf.mxu0
    %412 = vdwg.mxu0
    %vm413 = vcmp.ge.f32.partialorder %v405, 0.0
    %vm414 = vcmp.ge.f32.partialorder %v410, 0.0
    %v415 = vmul.f32 %v405, 0.2
    %v416 = vmul.f32 %v410, 0.2
    %v417 = vsel %vm413, %v405, %v415
    %v418 = vsel %vm414, %v410, %v416
    %vm419 = vcmask 523264
    %420 = vst.msk [vmem:[#allocation11] sm:$0xff] %vm419, %v417
    %421 = vst.msk [vmem:[#allocation11 + $0x8] sm:$0xff] %vm419, %v418
    %v422 = vld [vmem:[#allocation10] sm:$0xff]
    %v423 = vld [vmem:[#allocation10 + $0x8] sm:$0xff]
    %v424 = vld [vmem:[#allocation10 + $0x10] sm:$0xff]
    %v425 = vld [vmem:[#allocation10 + $0x18] sm:$0xff]
    %v426 = vld [vmem:[#allocation10 + $0x20] sm:$0xff]
    %v427 = vld [vmem:[#allocation10 + $0x28] sm:$0xff]
    %v428 = vld [vmem:[#allocation10 + $0x30] sm:$0xff]
    %v429 = vld [vmem:[#allocation10 + $0x38] sm:$0xff]
    %v430 = vld [vmem:[#allocation10 + $0x40] sm:$0xff]
    %v431 = vld [vmem:[#allocation10 + $0x48] sm:$0xff]
    %v432 = vld [vmem:[#allocation10 + $0x50] sm:$0xff]
    %v433 = vld [vmem:[#allocation10 + $0x58] sm:$0xff]
    %v434 = vld [vmem:[#allocation10 + $0x60] sm:$0xff]
    %v435 = vld [vmem:[#allocation10 + $0x68] sm:$0xff]
    %v436 = vld [vmem:[#allocation10 + $0x70] sm:$0xff]
    %v437 = vld [vmem:[#allocation10 + $0x78] sm:$0xff]
    %v438 = vld [vmem:[#allocation10 + $0x80] sm:$0xff]
    %v439 = vld [vmem:[#allocation10 + $0x88] sm:$0xff]
    %v440 = vld [vmem:[#allocation10 + $0x90] sm:$0xff]
    %v441 = vld [vmem:[#allocation10 + $0x98] sm:$0xff]
    %v442 = vld [vmem:[#allocation10 + $0xa0] sm:$0xff]
    %v443 = vld [vmem:[#allocation10 + $0xa8] sm:$0xff]
    %v444 = vld [vmem:[#allocation10 + $0xb0] sm:$0xff]
    %v445 = vld [vmem:[#allocation10 + $0xb8] sm:$0xff]
    %v446 = vld [vmem:[#allocation10 + $0xc0] sm:$0xff]
    %v447 = vld [vmem:[#allocation10 + $0xc8] sm:$0xff]
    %v448 = vld [vmem:[#allocation10 + $0xd0] sm:$0xff]
    %v449 = vld [vmem:[#allocation10 + $0xd8] sm:$0xff]
    %v450 = vld [vmem:[#allocation10 + $0xe0] sm:$0xff]
    %v451 = vld [vmem:[#allocation10 + $0xe8] sm:$0xff]
    %v452 = vld [vmem:[#allocation10 + $0xf0] sm:$0xff]
    %v453 = vld [vmem:[#allocation10 + $0xf8] sm:$0xff]
    %v454 = vld [vmem:[%s8] sm:$0x3]
    %v456 = vlaneseq
    %v457 = vshrl.u32 %v456, 7
    %v458 = vsub.s32 0, %v457
    %v459 = vrot.slane %v454, %v458
    %v460 = vlaneseq
    %v461 = vshrl.u32 %v460, 7
    %v462 = vsub.s32 1, %v461
    %v463 = vrot.slane %v454, %v462
    %466 = vmatprep.subr.mxu0 %v453
    %467 = vmatpush1.msra.mxu0 %v452
    %468 = vmatprep.subr.mxu0 %v451
    %469 = vmatpush1.msra.mxu0 %v450
    %470 = vmatprep.subr.mxu0 %v449
    %471 = vmatpush1.msra.mxu0 %v448
    %472 = vmatprep.subr.mxu0 %v447
    %473 = vmatpush1.msra.mxu0 %v446
    %474 = vmatprep.subr.mxu0 %v445
    %475 = vmatpush1.msra.mxu0 %v444
    %476 = vmatprep.subr.mxu0 %v443
    %477 = vmatpush1.msra.mxu0 %v442
    %478 = vmatprep.subr.mxu0 %v441
    %479 = vmatpush1.msra.mxu0 %v440
    %480 = vmatprep.subr.mxu0 %v439
    %481 = vmatpush1.msra.mxu0 %v438
    %482 = vmatprep.subr.mxu0 %v437
    %483 = vmatpush1.msra.mxu0 %v436
    %484 = vmatprep.subr.mxu0 %v435
    %485 = vmatpush1.msra.mxu0 %v434
    %486 = vmatprep.subr.mxu0 %v433
    %487 = vmatpush1.msra.mxu0 %v432
    %488 = vmatprep.subr.mxu0 %v431
    %489 = vmatpush1.msra.mxu0 %v430
    %490 = vmatprep.subr.mxu0 %v429
    %491 = vmatpush1.msra.mxu0 %v428
    %492 = vmatprep.subr.mxu0 %v427
    %493 = vmatpush1.msra.mxu0 %v426
    %494 = vmatprep.subr.mxu0 %v425
    %495 = vmatpush1.msra.mxu0 %v424
    %496 = vmatprep.subr.mxu0 %v423
    %497 = vmatpush1.msra.mxu0 %v422
    %498 = vmatprep.subr.mxu0 0.0
    %499 = vmatpush2.msra.mxu0 0.0
    %500 = vmatprep.subr.mxu0 0.0
    %501 = vmatpush2.msra.mxu0 0.0
    %502 = vmatprep.subr.mxu0 0.0
    %503 = vmatpush2.msra.mxu0 0.0
    %504 = vmatprep.subr.mxu0 0.0
    %505 = vmatpush2.msra.mxu0 0.0
    %506 = vmatprep.subr.mxu0 0.0
    %507 = vmatpush2.msra.mxu0 0.0
    %508 = vmatprep.subr.mxu0 0.0
    %509 = vmatpush2.msra.mxu0 0.0
    %510 = vmatprep.subr.mxu0 0.0
    %511 = vmatpush2.msra.mxu0 0.0
    %512 = vmatprep.subr.mxu0 0.0
    %513 = vmatpush2.msra.mxu0 0.0
    %514 = vmatprep.subr.mxu0 0.0
    %515 = vmatpush2.msra.mxu0 0.0
    %516 = vmatprep.subr.mxu0 0.0
    %517 = vmatpush2.msra.mxu0 0.0
    %518 = vmatprep.subr.mxu0 0.0
    %519 = vmatpush2.msra.mxu0 0.0
    %520 = vmatprep.subr.mxu0 0.0
    %521 = vmatpush2.msra.mxu0 0.0
    %522 = vmatprep.subr.mxu0 0.0
    %523 = vmatpush2.msra.mxu0 0.0
    %524 = vmatprep.subr.mxu0 0.0
    %525 = vmatpush2.msra.mxu0 0.0
    %526 = vmatprep.subr.mxu0 0.0
    %527 = vmatpush2.msra.mxu0 0.0
    %528 = vmatprep.subr.mxu0 0.0
    %529 = vmatpush2.msra.mxu0 0.0
    %530 = vmatprep.mubr.f32.mxu0 0.0
    %531 = vmatmul.mubr.f32.gmra.mxu0 %v417
    %v532 = vpop.f32.mrf.mxu0
    %v533 = vadd.f32 %v459, %v532
    %v534 = vpop.f32.mrf.mxu0
    %v535 = vadd.f32 %v463, %v534
    %536 = vmatprep.mubr.f32.mxu0 0.0
    %537 = vmatmul.mubr.f32.gmra.mxu0 %v418
    %v538 = vpop.f32.mrf.mxu0
    %v539 = vadd.f32 %v459, %v538
    %v540 = vpop.f32.mrf.mxu0
    %v541 = vadd.f32 %v463, %v540
    %542 = vdwg.mxu0
    %vm543 = vcmask 195584
    %544 = vst.msk [vmem:[#allocation12] sm:$0xff] %vm543, %v533
    %545 = vst.msk [vmem:[#allocation12 + $0x8] sm:$0xff] %vm543, %v539
    %546 = vst.msk [vmem:[#allocation14] sm:$0xff] %vm543, %v535
    %547 = vst.msk [vmem:[#allocation14 + $0x8] sm:$0xff] %vm543, %v541
    // Predicated region
    $region58: #{tpu_custom_call.1} parent=1 // pred_check
      _
    $region59: #{tpu_custom_call.1} parent=1 // pred_check_branch
      %549 = sbr.rel (0) target = $region61
    $region60: #{tpu_custom_call.1} parent=1 // pred_region
      %s551 = ssub.s32 256, 256
      %552 = vsyncadd [#allocation4], %s551
      %s553 = sshll.u32 [#allocation11], 4
      %s554 = int_to_ptr.vmem [resolvable:$true] %s553
      %559 = dma.vmem_to_hbm [thread:$0]  %s554, 256, %s9, [#allocation4], 128, 128, 8
    $region61: #{tpu_custom_call.1} parent=1 // pred_fallthru
      _
    // Predicated region
    $region62: #{tpu_custom_call.1} parent=1 // pred_check
      _
    $region63: #{tpu_custom_call.1} parent=1 // pred_check_branch
      %561 = sbr.rel (0) target = $region65
    $region64: #{tpu_custom_call.1} parent=1 // pred_region
      %s563 = ssub.s32 256, 256
      %564 = vsyncadd [#allocation13], %s563
      %s565 = sshll.u32 [#allocation12], 4
      %s566 = int_to_ptr.vmem [resolvable:$true] %s565
      %571 = dma.vmem_to_hbm [thread:$0]  %s566, 256, %s10, [#allocation13], 128, 128, 8
    $region65: #{tpu_custom_call.1} parent=1 // pred_fallthru
      _
    // Predicated region
    $region66: #{tpu_custom_call.1} parent=1 // pred_check
      _
    $region67: #{tpu_custom_call.1} parent=1 // pred_check_branch
      %573 = sbr.rel (0) target = $region69
    $region68: #{tpu_custom_call.1} parent=1 // pred_region
      %s575 = ssub.s32 256, 256
      %576 = vsyncadd [#allocation13], %s575
      %s577 = sshll.u32 [#allocation14], 4
      %s578 = int_to_ptr.vmem [resolvable:$true] %s577
      %583 = dma.vmem_to_hbm [thread:$0]  %s578, 256, %s11, [#allocation13], 128, 128, 8
    $region69: #{tpu_custom_call.1} parent=1 // pred_fallthru
      _
    // Predicated region
    $region70: #{tpu_custom_call.1} parent=1 // pred_check
      _
    $region71: #{tpu_custom_call.1} parent=1 // pred_check_branch
      %585 = sbr.rel (0) target = $region73
    $region72: #{tpu_custom_call.1} parent=1 // pred_region
      %586 = dma.done [#allocation4], 256
    $region73: #{tpu_custom_call.1} parent=1 // pred_fallthru
      _
    // Predicated region
    $region74: #{tpu_custom_call.1} parent=1 // pred_check
      _
    $region75: #{tpu_custom_call.1} parent=1 // pred_check_branch
      %588 = sbr.rel (0) target = $region77
    $region76: #{tpu_custom_call.1} parent=1 // pred_region
      %589 = dma.done [#allocation13], 256
    $region77: #{tpu_custom_call.1} parent=1 // pred_fallthru
      _
    // Predicated region
    $region78: #{tpu_custom_call.1} parent=1 // pred_check
      _
    $region79: #{tpu_custom_call.1} parent=1 // pred_check_branch
      %591 = sbr.rel (0) target = $region81
    $region80: #{tpu_custom_call.1} parent=1 // pred_region
      %592 = dma.done [#allocation13], 256
    $region81: #{tpu_custom_call.1} parent=1 // pred_fallthru
      _
    %593 = vsyncpa [#allocation3], 1
    %594 = vsyncpa [#allocation6], 1
    %595 = vsyncpa [#allocation9], 1
    %596 = vsyncpa [#allocation4], 1
    %597 = vsyncpa [#allocation13], 1

</llo_original>
